<compile_context>
chip_gen: v5e
topology: v5e:2x2
jax: 0.10.0
libtpu: 0.0.40
codegen_flags: <defaults>
</compile_context>

<pallas_src>
import functools

import jax
import jax.numpy as jnp
from jax.experimental import pallas as pl
from jax.experimental.pallas import tpu as pltpu

_LANE = 128


def _round_up(x, m):
    return -(-x // m) * m


def _pick_tile(total, cap):
    """Largest tile <= cap that divides `total` (total is a multiple of 128)."""
    t = min(total, cap)
    while total % t:
        t //= 2
    return t


# -----------------------------------------------------------------------------
# Pass 1: per-row kernel  ->  deep_col (B_pad, 1)  and  fm_row (1, B_pad)
# -----------------------------------------------------------------------------
def _make_row_kernel(n_hidden):
    def kernel(idx_ref, dense_ref, table_ref, w_ref, r_ref, deep_ref, fm_ref):
        tb = idx_ref.shape[0]
        v = table_ref.shape[0]                       # 128 (zero-padded vocab)

        # ---- fused embedding gather: one-hot (TB,128) @ table (128,128) -----
        lane_ids = jax.lax.broadcasted_iota(jnp.int32, (tb, v), 1)
        onehot = jnp.where(lane_ids == idx_ref[...], 1.0, 0.0).astype(jnp.bfloat16)
        emb = jnp.dot(onehot, table_ref[...],
                      preferred_element_type=jnp.float32)   # (TB,128); lanes>=E are 0

        # dense features were pre-shifted into lanes [E, E+D) by the wrapper,
        # so one VPU add builds the 128-lane-dense x = [emb | dense | 0].
        x = emb + dense_ref[...].astype(jnp.float32)        # (TB,128) f32

        # ---- deep MLP: full 128-lane bf16 MXU matmuls, f32 accumulation ------
        h = x
        for l in range(n_hidden):
            w = w_ref[:, l * _LANE:(l + 1) * _LANE]          # (128,128) bf16
            b = r_ref[0:1, l * _LANE:(l + 1) * _LANE]        # (1,128)  f32
            h = jnp.dot(h.astype(jnp.bfloat16), w,
                        preferred_element_type=jnp.float32) + b
            h = jnp.maximum(h, 0.0)

        wo_col = n_hidden * _LANE
        wfm_col = (n_hidden + 1) * _LANE
        sc_col = (n_hidden + 2) * _LANE
        wo = r_ref[0:1, wo_col:wo_col + _LANE]               # (1,128) f32
        wfm = r_ref[0:1, wfm_col:wfm_col + _LANE]            # (1,128) f32
        out_b = r_ref[0:1, sc_col:sc_col + 1]                # (1,1)
        fm_b = r_ref[0:1, sc_col + 1:sc_col + 2]             # (1,1)

        # Width-1 deep output: VPU multiply + XLU lane reduce (no N=1 MXU pass).
        deep_ref[...] = jnp.sum(h * wo, axis=1, keepdims=True) + out_b   # (TB,1)

        # FM first-order term, once per row, directly in ROW orientation:
        #   fm[0, j] = sum_k wfm[k] * x[j, k]  ->  (1,K) x (TB,K)^T = (1,TB).
        # Kept as a tiny M=1 dot_general (MXU is otherwise idle here) to avoid
        # a degenerate-dim transpose/relayout.
        fm_ref[...] = jax.lax.dot_general(
            wfm, x, dimension_numbers=(((1,), (1,)), ((), ())),
            preferred_element_type=jnp.float32) + fm_b       # (1,TB)

        # FM second-order term: identically zero with one sparse field
        # (sum_f(e)^2 == sum_f(e^2)); specialized out at trace time (F == 1).
    return kernel


# -----------------------------------------------------------------------------
# Pass 2: tiled broadcast + sigmoid,  out[i, j] = sigmoid(deep[i] + fm[j])
# -----------------------------------------------------------------------------
def _bcast_sigmoid_kernel(deep_ref, fm_ref, out_ref):
    # (TI,1) + (1,TJ) -> (TI,TJ); sigmoid on the EUP; f32 (VPU/EUP f32 on v5e).
    # TODO(synk): emit bf16 here if downstream tolerates it — halves the
    # dominant O(B^2) HBM write traffic at production batch sizes.
    out_ref[...] = jax.nn.sigmoid(deep_ref[...] + fm_ref[...]).astype(out_ref.dtype)


# -----------------------------------------------------------------------------
# Parameter init / packing
# -----------------------------------------------------------------------------
def init_params(key, num_sparse, num_dense, embed_dim, hidden_units):
    """Deterministic parameter init.  Linear weights stored as (in, out)."""
    n_layers = len(hidden_units)
    keys = jax.random.split(key, 3 + n_layers)
    params = {}
    params["embedding"] = 0.1 * jax.random.normal(
        keys[0], (num_sparse, embed_dim), jnp.float32)
    params["fm_w"] = 0.1 * jax.random.normal(
        keys[1], (num_sparse + num_dense, 1), jnp.float32)
    params["fm_b"] = jnp.full((1, 1), 0.01, jnp.float32)
    deep = []
    in_dim = embed_dim + num_dense
    for i, h in enumerate(hidden_units):
        w = 0.1 * jax.random.normal(keys[2 + i], (in_dim, h), jnp.float32)
        b = jnp.full((1, h), 0.01, jnp.float32)
        deep.append((w, b))
        in_dim = h
    params["deep"] = deep
    params["out_w"] = 0.1 * jax.random.normal(
        keys[2 + n_layers], (in_dim, 1), jnp.float32)
    params["out_b"] = jnp.full((1, 1), 0.01, jnp.float32)
    return params


def pack_params(params, num_dense, embed_dim, hidden_units):
    """Pack parameters into three 128-lane-aligned resident slabs (3 DMAs):
       table_pad (128,128) bf16 and w_slab (128,128*n_hidden) bf16 (MXU
       operands), r_slab (1,128*(n_hidden+3)) f32 (biases / head rows)."""
    E, D = embed_dim, num_dense
    V = params["embedding"].shape[0]
    n_hidden = len(hidden_units)
    assert V <= _LANE and E + D <= _LANE
    assert all(h <= _LANE for h in hidden_units)
    assert params["fm_w"].shape[0] == E + D, \
        "fm_linear only shape-consistent when embedding_dim == num_sparse_features"
    # TODO(synk): multi-stripe packing for hidden widths / vocab > 128.

    table_pad = jnp.zeros((_LANE, _LANE), jnp.bfloat16)
    table_pad = table_pad.at[:V, :E].set(params["embedding"].astype(jnp.bfloat16))

    w_slab = jnp.zeros((_LANE, _LANE * n_hidden), jnp.bfloat16)
    in_dims = [E + D] + list(hidden_units[:-1])
    for l, (k_in, h_out) in enumerate(zip(in_dims, hidden_units)):
        w, _ = params["deep"][l]
        w_slab = w_slab.at[:k_in, l * _LANE:l * _LANE + h_out].set(
            w.astype(jnp.bfloat16))

    # r_slab stripes: [b_0 | ... | b_{n-1} | out_w row | fm_w row | out_b,fm_b]
    r_slab = jnp.zeros((1, _LANE * (n_hidden + 3)), jnp.float32)
    for l in range(n_hidden):
        b = params["deep"][l][1]
        r_slab = r_slab.at[:, l * _LANE:l * _LANE + b.shape[1]].set(b)
    wo_col = n_hidden * _LANE
    wfm_col = (n_hidden + 1) * _LANE
    sc_col = (n_hidden + 2) * _LANE
    r_slab = r_slab.at[:, wo_col:wo_col + hidden_units[-1]].set(params["out_w"].T)
    r_slab = r_slab.at[:, wfm_col:wfm_col + (E + D)].set(params["fm_w"].T)
    r_slab = r_slab.at[:, sc_col:sc_col + 1].set(params["out_b"])
    r_slab = r_slab.at[:, sc_col + 1:sc_col + 2].set(params["fm_b"])
    return table_pad, w_slab, r_slab


# -----------------------------------------------------------------------------
# Forward wrapper (two pallas_calls under one jit)
# -----------------------------------------------------------------------------
@functools.partial(jax.jit, static_argnames=("n_hidden", "embed_dim", "num_dense"))
def deepfm_forward(table_pad, w_slab, r_slab, sparse_inputs, dense_inputs,
                   *, n_hidden, embed_dim, num_dense):
    B, F = sparse_inputs.shape
    assert F == 1, "reference module's shapes only line up for one sparse field"
    E, D = embed_dim, num_dense
    b_pad = _round_up(B, _LANE)      # lane-dense fm_row width / output columns

    # Wrapper-side padding (O(B) data only): indices and lane-shifted dense.
    idx = jnp.pad(sparse_inputs[:, :1].astype(jnp.int32),
                  ((0, b_pad - B), (0, 0)))
    dense_shift = jnp.pad(dense_inputs,
                          ((0, b_pad - B), (E, _LANE - E - D))).astype(jnp.bfloat16)

    # ---------------- Pass 1: O(B) row pass -----------------------------------
    tb = _pick_tile(b_pad, 256)
    flops1 = 2 * b_pad * _LANE * _LANE * (n_hidden + 2)
    bytes1 = ((4 + 2 * _LANE + 8) * b_pad
              + 2 * _LANE * _LANE * (1 + n_hidden)
              + 4 * _LANE * (n_hidden + 3))
    deep_col, fm_row = pl.pallas_call(
        _make_row_kernel(n_hidden),
        out_shape=(jax.ShapeDtypeStruct((b_pad, 1), jnp.float32),
                   jax.ShapeDtypeStruct((1, b_pad), jnp.float32)),
        grid=(b_pad // tb,),
        in_specs=[
            pl.BlockSpec((tb, 1), lambda i: (i, 0)),           # sparse indices
            pl.BlockSpec((tb, _LANE), lambda i: (i, 0)),       # lane-shifted dense
            pl.BlockSpec(table_pad.shape, lambda i: (0, 0)),   # resident slabs
            pl.BlockSpec(w_slab.shape, lambda i: (0, 0)),
            pl.BlockSpec(r_slab.shape, lambda i: (0, 0)),
        ],
        out_specs=(pl.BlockSpec((tb, 1), lambda i: (i, 0)),
                   pl.BlockSpec((1, tb), lambda i: (0, i))),
        compiler_params=pltpu.CompilerParams(
            dimension_semantics=("parallel",),
            vmem_limit_bytes=32 * 1024 * 1024),
        cost_estimate=pl.CostEstimate(flops=flops1, transcendentals=0,
                                      bytes_accessed=bytes1),
    )(idx, dense_shift, table_pad, w_slab, r_slab)

    # ---------------- Pass 2: O(B^2) memory-bound broadcast + sigmoid --------
    ti = _pick_tile(b_pad, 512)
    tj = _pick_tile(b_pad, 1024)     # lane-dense (>=128) unmasked output stores
    out_pad = pl.pallas_call(
        _bcast_sigmoid_kernel,
        out_shape=jax.ShapeDtypeStruct((b_pad, b_pad), jnp.float32),
        grid=(b_pad // ti, b_pad // tj),
        in_specs=[pl.BlockSpec((ti, 1), lambda i, j: (i, 0)),
                  pl.BlockSpec((1, tj), lambda i, j: (0, j))],
        out_specs=pl.BlockSpec((ti, tj), lambda i, j: (i, j)),
        compiler_params=pltpu.CompilerParams(
            dimension_semantics=("parallel", "parallel"),
            vmem_limit_bytes=32 * 1024 * 1024),
        cost_estimate=pl.CostEstimate(flops=b_pad * b_pad,
                                      transcendentals=b_pad * b_pad,
                                      bytes_accessed=4 * b_pad * b_pad + 8 * b_pad),
    )(deep_col, fm_row)

    return out_pad[:B, :B]


# -----------------------------------------------------------------------------
# Pure-JAX reference matching the PyTorch forward semantics exactly (f32)
# -----------------------------------------------------------------------------
def deepfm_reference(params, sparse_inputs, dense_inputs):
    emb = jnp.take(params["embedding"], sparse_inputs, axis=0)   # (B, F, E)
    sparse_sum = jnp.sum(emb, axis=1)                            # (B, E)
    fm_input = jnp.concatenate([sparse_sum, dense_inputs], axis=1)
    fm_lin = (fm_input @ params["fm_w"] + params["fm_b"])[:, 0]  # (B,)
    fm_out = 0.5 * jnp.sum(sparse_sum ** 2 - jnp.sum(emb ** 2, axis=1),
                           axis=1, keepdims=True)                # (B, 1)
    deep = jnp.concatenate([emb.reshape(emb.shape[0], -1), dense_inputs], axis=1)
    for w, b in params["deep"]:
        deep = jnp.maximum(deep @ w + b, 0.0)
    deep = deep @ params["out_w"] + params["out_b"]              # (B, 1)
    logits = fm_lin + fm_out + deep                              # -> (B, B)
    return jax.nn.sigmoid(logits)


if __name__ == "__main__":
    # Module hyper-parameters (shape-consistent with the PyTorch forward).
    num_sparse_features = 32   # embedding vocab; must equal embedding_dim
    num_dense_features = 16
    embedding_dim = 32
    hidden_units = [64, 32]
    B, F = 8, 1                # F must be 1 for the module's shapes to line up

    key = jax.random.PRNGKey(0)
    kp, ks, kd = jax.random.split(key, 3)
    params = init_params(kp, num_sparse_features, num_dense_features,
                         embedding_dim, hidden_units)
    sparse_inputs = jax.random.randint(ks, (B, F), 0, num_sparse_features,
                                       dtype=jnp.int32)
    dense_inputs = jax.random.normal(kd, (B, num_dense_features), jnp.float32)

    table_pad, w_slab, r_slab = pack_params(params, num_dense_features,
                                            embedding_dim, hidden_units)
    out = deepfm_forward(table_pad, w_slab, r_slab, sparse_inputs, dense_inputs,
                         n_hidden=len(hidden_units), embed_dim=embedding_dim,
                         num_dense=num_dense_features)
    out = jax.block_until_ready(out)

    ref = deepfm_reference(params, sparse_inputs, dense_inputs)
    assert out.shape == (B, B), out.shape
    # bf16 MXU operands -> relaxed tolerance vs. the pure-f32 reference.
    if not jnp.allclose(out, ref, atol=2e-2, rtol=2e-2):
        err = float(jnp.max(jnp.abs(out - ref)))
        raise ValueError(f"Pallas kernel mismatches JAX reference (max err {err})")
    print("KERNEL_OK")
</pallas_src>

<mosaic_0001>
module attributes {stable_mosaic.version = 11 : i64} {
  func.func @_bcast_sigmoid_kernel(%arg0: i32, %arg1: i32, %arg2: memref<128x1xf32, #tpu.memory_space<vmem>>, %arg3: memref<1x128xf32, #tpu.memory_space<vmem>>, %arg4: memref<128x128xf32, #tpu.memory_space<vmem>>) attributes {dimension_semantics = [#tpu.dimension_semantics<parallel>, #tpu.dimension_semantics<parallel>], iteration_bounds = array<i64: 1, 1>, scalar_prefetch = 0 : i64, scratch_operands = 0 : i64, tpu.core_type = #tpu.core_type<tc>, window_params = [{transform_indices = @transform_0, window_bounds = array<i64: 128, 1>}, {transform_indices = @transform_1, window_bounds = array<i64: 1, 128>}, {transform_indices = @transform_2, window_bounds = array<i64: 128, 128>}]} {
    %c0 = arith.constant 0 : index
    %c0_0 = arith.constant 0 : index
    %0 = vector.load %arg2[%c0, %c0_0] : memref<128x1xf32, #tpu.memory_space<vmem>>, vector<128x1xf32>
    %c0_1 = arith.constant 0 : index
    %c0_2 = arith.constant 0 : index
    %1 = vector.load %arg3[%c0_1, %c0_2] : memref<1x128xf32, #tpu.memory_space<vmem>>, vector<1x128xf32>
    %2 = vector.broadcast %0 : vector<128x1xf32> to vector<128x128xf32>
    %3 = vector.broadcast %1 : vector<1x128xf32> to vector<128x128xf32>
    %4 = arith.addf %2, %3 : vector<128x128xf32>
    %5 = arith.negf %4 : vector<128x128xf32>
    %6 = math.exp %5 : vector<128x128xf32>
    %cst = arith.constant 1.000000e+00 : f32
    %7 = vector.broadcast %cst : f32 to vector<128x128xf32>
    %8 = arith.addf %7, %6 : vector<128x128xf32>
    %9 = arith.divf %7, %8 : vector<128x128xf32>
    %c0_3 = arith.constant 0 : index
    %c0_4 = arith.constant 0 : index
    %10 = vector.load %arg4[%c0_3, %c0_4] : memref<128x128xf32, #tpu.memory_space<vmem>>, vector<128x128xf32>
    tpu.vector_store %arg4[%c0_3, %c0_4], %9 {strides = array<i32>} : memref<128x128xf32, #tpu.memory_space<vmem>>, vector<128x128xf32>,
    return
  }
  func.func @transform_0(%arg0: i32, %arg1: i32) -> (i32, i32) {
    %c0_i32 = arith.constant 0 : i32
    %c0_i32_0 = arith.constant 0 : i32
    return %arg0, %c0_i32 : i32, i32
  }
  func.func @transform_1(%arg0: i32, %arg1: i32) -> (i32, i32) {
    %c0_i32 = arith.constant 0 : i32
    %c0_i32_0 = arith.constant 0 : i32
    return %c0_i32, %arg1 : i32, i32
  }
  func.func @transform_2(%arg0: i32, %arg1: i32) -> (i32, i32) {
    %c0_i32 = arith.constant 0 : i32
    return %arg0, %arg1 : i32, i32
  }
}

module attributes {stable_mosaic.version = 11 : i64} {
  func.func @kernel(%arg0: i32, %arg1: memref<128x1xi32, #tpu.memory_space<vmem>>, %arg2: memref<128x128xbf16, #tpu.memory_space<vmem>>, %arg3: memref<128x128xbf16, #tpu.memory_space<vmem>>, %arg4: memref<128x256xbf16, #tpu.memory_space<vmem>>, %arg5: memref<1x640xf32, #tpu.memory_space<vmem>>, %arg6: memref<128x1xf32, #tpu.memory_space<vmem>>, %arg7: memref<1x128xf32, #tpu.memory_space<vmem>>) attributes {dimension_semantics = [#tpu.dimension_semantics<parallel>], iteration_bounds = array<i64: 1>, scalar_prefetch = 0 : i64, scratch_operands = 0 : i64, tpu.core_type = #tpu.core_type<tc>, window_params = [{transform_indices = @transform_0, window_bounds = array<i64: 128, 1>}, {transform_indices = @transform_1, window_bounds = array<i64: 128, 128>}, {pipeline_mode = #tpu.pipeline_mode<synchronous>, transform_indices = @transform_2, window_bounds = array<i64: 128, 128>}, {pipeline_mode = #tpu.pipeline_mode<synchronous>, transform_indices = @transform_3, window_bounds = array<i64: 128, 256>}, {pipeline_mode = #tpu.pipeline_mode<synchronous>, transform_indices = @transform_4, window_bounds = array<i64: 1, 640>}, {transform_indices = @transform_5, window_bounds = array<i64: 128, 1>}, {transform_indices = @transform_6, window_bounds = array<i64: 1, 128>}]} {
    %0 = tpu.iota {dimensions = array<i32: 1>} : vector<128x128xi32>
    %c0 = arith.constant 0 : index
    %c0_0 = arith.constant 0 : index
    %1 = vector.load %arg1[%c0, %c0_0] : memref<128x1xi32, #tpu.memory_space<vmem>>, vector<128x1xi32>
    %2 = vector.broadcast %1 : vector<128x1xi32> to vector<128x128xi32>
    %3 = arith.cmpi eq, %0, %2 : vector<128x128xi32>
    %cst = arith.constant 1.000000e+00 : f32
    %cst_1 = arith.constant 0.000000e+00 : f32
    %4 = vector.broadcast %cst : f32 to vector<128x128xf32>
    %5 = vector.broadcast %cst_1 : f32 to vector<128x128xf32>
    %6 = arith.select %3, %4, %5 : vector<128x128xi1>, vector<128x128xf32>
    %7 = arith.truncf %6 : vector<128x128xf32> to vector<128x128xbf16>
    %c0_2 = arith.constant 0 : index
    %c0_3 = arith.constant 0 : index
    %8 = vector.load %arg3[%c0_2, %c0_3] : memref<128x128xbf16, #tpu.memory_space<vmem>>, vector<128x128xbf16>
    %cst_4 = arith.constant dense<0.000000e+00> : vector<128x128xf32>
    %9 = tpu.matmul %7, %8, %cst_4 {dimension_numbers = #tpu.dot_dimension_numbers<[1], [0], [0], [1], [0, 0, 1, 1], [], []>} : vector<128x128xbf16>, vector<128x128xbf16>, vector<128x128xf32> -> vector<128x128xf32>
    %c0_5 = arith.constant 0 : index
    %c0_6 = arith.constant 0 : index
    %10 = vector.load %arg2[%c0_5, %c0_6] : memref<128x128xbf16, #tpu.memory_space<vmem>>, vector<128x128xbf16>
    %11 = arith.extf %10 : vector<128x128xbf16> to vector<128x128xf32>
    %12 = arith.addf %9, %11 : vector<128x128xf32>
    %c0_7 = arith.constant 0 : index
    %c0_8 = arith.constant 0 : index
    %13 = vector.load %arg4[%c0_7, %c0_8] : memref<128x256xbf16, #tpu.memory_space<vmem>>, vector<128x128xbf16>
    %c0_9 = arith.constant 0 : index
    %c0_10 = arith.constant 0 : index
    %14 = vector.load %arg5[%c0_9, %c0_10] : memref<1x640xf32, #tpu.memory_space<vmem>>, vector<1x128xf32>
    %15 = arith.truncf %12 : vector<128x128xf32> to vector<128x128xbf16>
    %cst_11 = arith.constant dense<0.000000e+00> : vector<128x128xf32>
    %16 = tpu.matmul %15, %13, %cst_11 {dimension_numbers = #tpu.dot_dimension_numbers<[1], [0], [0], [1], [0, 0, 1, 1], [], []>} : vector<128x128xbf16>, vector<128x128xbf16>, vector<128x128xf32> -> vector<128x128xf32>
    %17 = vector.broadcast %14 : vector<1x128xf32> to vector<128x128xf32>
    %18 = arith.addf %16, %17 : vector<128x128xf32>
    %cst_12 = arith.constant 0.000000e+00 : f32
    %19 = vector.broadcast %cst_12 : f32 to vector<128x128xf32>
    %20 = arith.maximumf %18, %19 : vector<128x128xf32>
    %c0_13 = arith.constant 0 : index
    %c128 = arith.constant 128 : index
    %21 = vector.load %arg4[%c0_13, %c128] : memref<128x256xbf16, #tpu.memory_space<vmem>>, vector<128x128xbf16>
    %c0_14 = arith.constant 0 : index
    %c128_15 = arith.constant 128 : index
    %22 = vector.load %arg5[%c0_14, %c128_15] : memref<1x640xf32, #tpu.memory_space<vmem>>, vector<1x128xf32>
    %23 = arith.truncf %20 : vector<128x128xf32> to vector<128x128xbf16>
    %cst_16 = arith.constant dense<0.000000e+00> : vector<128x128xf32>
    %24 = tpu.matmul %23, %21, %cst_16 {dimension_numbers = #tpu.dot_dimension_numbers<[1], [0], [0], [1], [0, 0, 1, 1], [], []>} : vector<128x128xbf16>, vector<128x128xbf16>, vector<128x128xf32> -> vector<128x128xf32>
    %25 = vector.broadcast %22 : vector<1x128xf32> to vector<128x128xf32>
    %26 = arith.addf %24, %25 : vector<128x128xf32>
    %cst_17 = arith.constant 0.000000e+00 : f32
    %27 = vector.broadcast %cst_17 : f32 to vector<128x128xf32>
    %28 = arith.maximumf %26, %27 : vector<128x128xf32>
    %c0_18 = arith.constant 0 : index
    %c256 = arith.constant 256 : index
    %29 = vector.load %arg5[%c0_18, %c256] : memref<1x640xf32, #tpu.memory_space<vmem>>, vector<1x128xf32>
    %c0_19 = arith.constant 0 : index
    %c384 = arith.constant 384 : index
    %30 = vector.load %arg5[%c0_19, %c384] : memref<1x640xf32, #tpu.memory_space<vmem>>, vector<1x128xf32>
    %c0_20 = arith.constant 0 : index
    %c512 = arith.constant 512 : index
    %31 = vector.load %arg5[%c0_20, %c512] : memref<1x640xf32, #tpu.memory_space<vmem>>, vector<1x1xf32>
    %c0_21 = arith.constant 0 : index
    %c513 = arith.constant 513 : index
    %32 = vector.load %arg5[%c0_21, %c513] : memref<1x640xf32, #tpu.memory_space<vmem>>, vector<1x1xf32>
    %33 = vector.broadcast %29 : vector<1x128xf32> to vector<128x128xf32>
    %34 = arith.mulf %28, %33 : vector<128x128xf32>
    %cst_22 = arith.constant dense<0.000000e+00> : vector<128xf32>
    %35 = vector.multi_reduction <add>, %34, %cst_22 [1] : vector<128x128xf32> to vector<128xf32>
    %36 = vector.shape_cast %35 : vector<128xf32> to vector<128x1xf32>
    %37 = vector.broadcast %31 : vector<1x1xf32> to vector<128x1xf32>
    %38 = arith.addf %36, %37 : vector<128x1xf32>
    %c0_23 = arith.constant 0 : index
    %c0_24 = arith.constant 0 : index
    %39 = vector.load %arg6[%c0_23, %c0_24] : memref<128x1xf32, #tpu.memory_space<vmem>>, vector<128x1xf32>
    tpu.vector_store %arg6[%c0_23, %c0_24], %38 {strides = array<i32>} : memref<128x1xf32, #tpu.memory_space<vmem>>, vector<128x1xf32>,
    %cst_25 = arith.constant dense<0.000000e+00> : vector<1x128xf32>
    %40 = tpu.matmul %30, %12, %cst_25 {dimension_numbers = #tpu.dot_dimension_numbers<[1], [1], [0], [0], [0, 0, 1, 0], [], []>} : vector<1x128xf32>, vector<128x128xf32>, vector<1x128xf32> -> vector<1x128xf32>
    %41 = vector.broadcast %32 : vector<1x1xf32> to vector<1x128xf32>
    %42 = arith.addf %40, %41 : vector<1x128xf32>
    %c0_26 = arith.constant 0 : index
    %c0_27 = arith.constant 0 : index
    %43 = vector.load %arg7[%c0_26, %c0_27] : memref<1x128xf32, #tpu.memory_space<vmem>>, vector<1x128xf32>
    tpu.vector_store %arg7[%c0_26, %c0_27], %42 {strides = array<i32>} : memref<1x128xf32, #tpu.memory_space<vmem>>, vector<1x128xf32>,
    return
  }
  func.func @transform_0(%arg0: i32) -> (i32, i32) {
    %c0_i32 = arith.constant 0 : i32
    %c0_i32_0 = arith.constant 0 : i32
    return %arg0, %c0_i32 : i32, i32
  }
  func.func @transform_1(%arg0: i32) -> (i32, i32) {
    %c0_i32 = arith.constant 0 : i32
    %c0_i32_0 = arith.constant 0 : i32
    return %arg0, %c0_i32 : i32, i32
  }
  func.func @transform_2(%arg0: i32) -> (i32, i32) {
    %c0_i32 = arith.constant 0 : i32
    %c0_i32_0 = arith.constant 0 : i32
    %c0_i32_1 = arith.constant 0 : i32
    return %c0_i32, %c0_i32_0 : i32, i32
  }
  func.func @transform_3(%arg0: i32) -> (i32, i32) {
    %c0_i32 = arith.constant 0 : i32
    %c0_i32_0 = arith.constant 0 : i32
    %c0_i32_1 = arith.constant 0 : i32
    return %c0_i32, %c0_i32_0 : i32, i32
  }
  func.func @transform_4(%arg0: i32) -> (i32, i32) {
    %c0_i32 = arith.constant 0 : i32
    %c0_i32_0 = arith.constant 0 : i32
    %c0_i32_1 = arith.constant 0 : i32
    return %c0_i32, %c0_i32_0 : i32, i32
  }
  func.func @transform_5(%arg0: i32) -> (i32, i32) {
    %c0_i32 = arith.constant 0 : i32
    %c0_i32_0 = arith.constant 0 : i32
    return %arg0, %c0_i32 : i32, i32
  }
  func.func @transform_6(%arg0: i32) -> (i32, i32) {
    %c0_i32 = arith.constant 0 : i32
    %c0_i32_0 = arith.constant 0 : i32
    return %c0_i32, %arg0 : i32, i32
  }
}

</mosaic_0001>

<llo_original>
// kernel: deepfm_forward.3
$region0: #{deepfm_forward.3}
  #allocation0 [shape = 'u32[]', space=smem, size = 0x4, offset = 0x4, fixed_abs, tag = 'smem constant byte address 0x4 - core index']
  #allocation1 [shape = 'u32[72,128]{1,0:T(1,128)}', space=vmem, size = 0x9000, scoped, tag = 'internal scratch']
  %s0 = inlined_call_operand.vmem [shape: f32[128,1], index: 0, kind: input, shape index: {}]
  %s1 = inlined_call_operand.vmem [shape: f32[1,128], index: 1, kind: input, shape index: {}]
  %s2 = inlined_call_operand.vmem [shape: f32[128,128], index: 2, kind: output, shape index: {}]
  %s3 = sld [smem:[#allocation0]]
  $region18: #{deepfm_forward.3} parent=0
    _
  %s5 = ssub.s32 1, %s3
  %s6 = scalar_select 0, %s5, %s3
  // Predicated region
  $region2: #{deepfm_forward.3} parent=0 // pred_check
    _
  $region3: #{deepfm_forward.3} parent=0 // pred_check_branch
    %8 = sbr.rel (0) target = $region5
  $region4: #{deepfm_forward.3} parent=0 // pred_region
    _
  $region5: #{deepfm_forward.3} parent=0 // pred_fallthru
    _
  // Predicated region
  $region6: #{deepfm_forward.3} parent=0 // pred_check
    _
  $region7: #{deepfm_forward.3} parent=0 // pred_check_branch
    %10 = sbr.rel (0) target = $region9
  $region8: #{deepfm_forward.3} parent=0 // pred_region
    _
  $region9: #{deepfm_forward.3} parent=0 // pred_fallthru
    _
  %v11 = vld [vmem:[%s0] sm:$0xff]
  %v12 = vld [vmem:[%s0 + $0x8] sm:$0xff]
  %v13 = vld [vmem:[%s0 + $0x10] sm:$0xff]
  %v14 = vld [vmem:[%s0 + $0x18] sm:$0xff]
  %v15 = vld [vmem:[%s0 + $0x20] sm:$0xff]
  %v16 = vld [vmem:[%s0 + $0x28] sm:$0xff]
  %v17 = vld [vmem:[%s0 + $0x30] sm:$0xff]
  %v18 = vld [vmem:[%s0 + $0x38] sm:$0xff]
  %v19 = vld [vmem:[%s0 + $0x40] sm:$0xff]
  %v20 = vld [vmem:[%s0 + $0x48] sm:$0xff]
  %v21 = vld [vmem:[%s0 + $0x50] sm:$0xff]
  %v22 = vld [vmem:[%s0 + $0x58] sm:$0xff]
  %v23 = vld [vmem:[%s0 + $0x60] sm:$0xff]
  %v24 = vld [vmem:[%s0 + $0x68] sm:$0xff]
  %v25 = vld [vmem:[%s0 + $0x70] sm:$0xff]
  %v26 = vld [vmem:[%s0 + $0x78] sm:$0xff]
  %v27 = vld [vmem:[%s1] sm:$0x1]
  %29 = vset.pattern.permute.xlu0 0
  %30 = vperm.xlu0 %29, %v11
  %v31 = vpop.permute.xlu0 %30
  %34 = vset.pattern.permute.xlu0 0
  %35 = vperm.xlu0 %34, %v12
  %v36 = vpop.permute.xlu0 %35
  %39 = vset.pattern.permute.xlu0 0
  %40 = vperm.xlu0 %39, %v13
  %v41 = vpop.permute.xlu0 %40
  %44 = vset.pattern.permute.xlu0 0
  %45 = vperm.xlu0 %44, %v14
  %v46 = vpop.permute.xlu0 %45
  %49 = vset.pattern.permute.xlu0 0
  %50 = vperm.xlu0 %49, %v15
  %v51 = vpop.permute.xlu0 %50
  %54 = vset.pattern.permute.xlu0 0
  %55 = vperm.xlu0 %54, %v16
  %v56 = vpop.permute.xlu0 %55
  %59 = vset.pattern.permute.xlu0 0
  %60 = vperm.xlu0 %59, %v17
  %v61 = vpop.permute.xlu0 %60
  %64 = vset.pattern.permute.xlu0 0
  %65 = vperm.xlu0 %64, %v18
  %v66 = vpop.permute.xlu0 %65
  %69 = vset.pattern.permute.xlu0 0
  %70 = vperm.xlu0 %69, %v19
  %v71 = vpop.permute.xlu0 %70
  %74 = vset.pattern.permute.xlu0 0
  %75 = vperm.xlu0 %74, %v20
  %v76 = vpop.permute.xlu0 %75
  %79 = vset.pattern.permute.xlu0 0
  %80 = vperm.xlu0 %79, %v21
  %v81 = vpop.permute.xlu0 %80
  %84 = vset.pattern.permute.xlu0 0
  %85 = vperm.xlu0 %84, %v22
  %v86 = vpop.permute.xlu0 %85
  %89 = vset.pattern.permute.xlu0 0
  %90 = vperm.xlu0 %89, %v23
  %v91 = vpop.permute.xlu0 %90
  %94 = vset.pattern.permute.xlu0 0
  %95 = vperm.xlu0 %94, %v24
  %v96 = vpop.permute.xlu0 %95
  %99 = vset.pattern.permute.xlu0 0
  %100 = vperm.xlu0 %99, %v25
  %v101 = vpop.permute.xlu0 %100
  %104 = vset.pattern.permute.xlu0 0
  %105 = vperm.xlu0 %104, %v26
  %v106 = vpop.permute.xlu0 %105
  %v109 = vperm.slane %v27, 0
  %v111 = vadd.f32 %v31, %v109
  %v112 = vadd.f32 %v36, %v109
  %v113 = vadd.f32 %v41, %v109
  %v114 = vadd.f32 %v46, %v109
  %v115 = vadd.f32 %v51, %v109
  %v116 = vadd.f32 %v56, %v109
  %v117 = vadd.f32 %v61, %v109
  %v118 = vadd.f32 %v66, %v109
  %v119 = vadd.f32 %v71, %v109
  %v120 = vadd.f32 %v76, %v109
  %v121 = vadd.f32 %v81, %v109
  %v122 = vadd.f32 %v86, %v109
  %v123 = vadd.f32 %v91, %v109
  %v124 = vadd.f32 %v96, %v109
  %v125 = vadd.f32 %v101, %v109
  %v126 = vadd.f32 %v106, %v109
  %v127 = vxor.u32 %v111, 2147483648
  %v128 = vxor.u32 %v112, 2147483648
  %v129 = vxor.u32 %v113, 2147483648
  %v130 = vxor.u32 %v114, 2147483648
  %v131 = vxor.u32 %v115, 2147483648
  %v132 = vxor.u32 %v116, 2147483648
  %v133 = vxor.u32 %v117, 2147483648
  %v134 = vxor.u32 %v118, 2147483648
  %v135 = vxor.u32 %v119, 2147483648
  %v136 = vxor.u32 %v120, 2147483648
  %v137 = vxor.u32 %v121, 2147483648
  %v138 = vxor.u32 %v122, 2147483648
  %v139 = vxor.u32 %v123, 2147483648
  %v140 = vxor.u32 %v124, 2147483648
  %v141 = vxor.u32 %v125, 2147483648
  %v142 = vxor.u32 %v126, 2147483648
  %v143 = vmul.f32 %v127, 1.442695
  %v144 = vpow.pop %v143
  %v145 = vmul.f32 %v128, 1.442695
  %v146 = vpow.pop %v145
  %v147 = vmul.f32 %v129, 1.442695
  %v148 = vpow.pop %v147
  %v149 = vmul.f32 %v130, 1.442695
  %v150 = vpow.pop %v149
  %v151 = vmul.f32 %v131, 1.442695
  %v152 = vpow.pop %v151
  %v153 = vmul.f32 %v132, 1.442695
  %v154 = vpow.pop %v153
  %v155 = vmul.f32 %v133, 1.442695
  %v156 = vpow.pop %v155
  %v157 = vmul.f32 %v134, 1.442695
  %v158 = vpow.pop %v157
  %v159 = vmul.f32 %v135, 1.442695
  %v160 = vpow.pop %v159
  %v161 = vmul.f32 %v136, 1.442695
  %v162 = vpow.pop %v161
  %v163 = vmul.f32 %v137, 1.442695
  %v164 = vpow.pop %v163
  %v165 = vmul.f32 %v138, 1.442695
  %v166 = vpow.pop %v165
  %v167 = vmul.f32 %v139, 1.442695
  %v168 = vpow.pop %v167
  %v169 = vmul.f32 %v140, 1.442695
  %v170 = vpow.pop %v169
  %v171 = vmul.f32 %v141, 1.442695
  %v172 = vpow.pop %v171
  %v173 = vmul.f32 %v142, 1.442695
  %v174 = vpow.pop %v173
  %v175 = vadd.f32 %v144, 1.0
  %v176 = vadd.f32 %v146, 1.0
  %v177 = vadd.f32 %v148, 1.0
  %v178 = vadd.f32 %v150, 1.0
  %v179 = vadd.f32 %v152, 1.0
  %v180 = vadd.f32 %v154, 1.0
  %v181 = vadd.f32 %v156, 1.0
  %v182 = vadd.f32 %v158, 1.0
  %v183 = vadd.f32 %v160, 1.0
  %v184 = vadd.f32 %v162, 1.0
  %v185 = vadd.f32 %v164, 1.0
  %v186 = vadd.f32 %v166, 1.0
  %v187 = vadd.f32 %v168, 1.0
  %v188 = vadd.f32 %v170, 1.0
  %v189 = vadd.f32 %v172, 1.0
  %v190 = vadd.f32 %v174, 1.0
  %v191 = vrcp.pop %v175
  %v192 = vmul.f32 %v175, %v191
  %v193 = vsub.f32 1.0, %v192
  %v194 = vmul.f32 %v191, %v193
  %v195 = vadd.f32 %v191, %v194
  %vm196 = vweird.f32 %v175
  %vm197 = vweird.f32 %v191
  %vm198 = vmor %vm196, %vm197
  %v199 = vsel %vm198, %v191, %v195
  %v200 = vand.u32 2147483647, %v175
  %vm201 = vcmp.eq.f32.partialorder %v200, 8.507059e+37
  %v202 = vand.u32 %v175, 2147483648
  %v203 = vor.u32 1.1754944e-38, %v202
  %v204 = vsel %vm201, %v203, %v199
  %v205 = vmul.f32 1.0, %v204
  %v206 = vrcp.pop %v176
  %v207 = vmul.f32 %v176, %v206
  %v208 = vsub.f32 1.0, %v207
  %v209 = vmul.f32 %v206, %v208
  %v210 = vadd.f32 %v206, %v209
  %vm211 = vweird.f32 %v176
  %vm212 = vweird.f32 %v206
  %vm213 = vmor %vm211, %vm212
  %v214 = vsel %vm213, %v206, %v210
  %v215 = vand.u32 2147483647, %v176
  %vm216 = vcmp.eq.f32.partialorder %v215, 8.507059e+37
  %v217 = vand.u32 %v176, 2147483648
  %v218 = vor.u32 1.1754944e-38, %v217
  %v219 = vsel %vm216, %v218, %v214
  %v220 = vmul.f32 1.0, %v219
  %v221 = vrcp.pop %v177
  %v222 = vmul.f32 %v177, %v221
  %v223 = vsub.f32 1.0, %v222
  %v224 = vmul.f32 %v221, %v223
  %v225 = vadd.f32 %v221, %v224
  %vm226 = vweird.f32 %v177
  %vm227 = vweird.f32 %v221
  %vm228 = vmor %vm226, %vm227
  %v229 = vsel %vm228, %v221, %v225
  %v230 = vand.u32 2147483647, %v177
  %vm231 = vcmp.eq.f32.partialorder %v230, 8.507059e+37
  %v232 = vand.u32 %v177, 2147483648
  %v233 = vor.u32 1.1754944e-38, %v232
  %v234 = vsel %vm231, %v233, %v229
  %v235 = vmul.f32 1.0, %v234
  %v236 = vrcp.pop %v178
  %v237 = vmul.f32 %v178, %v236
  %v238 = vsub.f32 1.0, %v237
  %v239 = vmul.f32 %v236, %v238
  %v240 = vadd.f32 %v236, %v239
  %vm241 = vweird.f32 %v178
  %vm242 = vweird.f32 %v236
  %vm243 = vmor %vm241, %vm242
  %v244 = vsel %vm243, %v236, %v240
  %v245 = vand.u32 2147483647, %v178
  %vm246 = vcmp.eq.f32.partialorder %v245, 8.507059e+37
  %v247 = vand.u32 %v178, 2147483648
  %v248 = vor.u32 1.1754944e-38, %v247
  %v249 = vsel %vm246, %v248, %v244
  %v250 = vmul.f32 1.0, %v249
  %v251 = vrcp.pop %v179
  %v252 = vmul.f32 %v179, %v251
  %v253 = vsub.f32 1.0, %v252
  %v254 = vmul.f32 %v251, %v253
  %v255 = vadd.f32 %v251, %v254
  %vm256 = vweird.f32 %v179
  %vm257 = vweird.f32 %v251
  %vm258 = vmor %vm256, %vm257
  %v259 = vsel %vm258, %v251, %v255
  %v260 = vand.u32 2147483647, %v179
  %vm261 = vcmp.eq.f32.partialorder %v260, 8.507059e+37
  %v262 = vand.u32 %v179, 2147483648
  %v263 = vor.u32 1.1754944e-38, %v262
  %v264 = vsel %vm261, %v263, %v259
  %v265 = vmul.f32 1.0, %v264
  %v266 = vrcp.pop %v180
  %v267 = vmul.f32 %v180, %v266
  %v268 = vsub.f32 1.0, %v267
  %v269 = vmul.f32 %v266, %v268
  %v270 = vadd.f32 %v266, %v269
  %vm271 = vweird.f32 %v180
  %vm272 = vweird.f32 %v266
  %vm273 = vmor %vm271, %vm272
  %v274 = vsel %vm273, %v266, %v270
  %v275 = vand.u32 2147483647, %v180
  %vm276 = vcmp.eq.f32.partialorder %v275, 8.507059e+37
  %v277 = vand.u32 %v180, 2147483648
  %v278 = vor.u32 1.1754944e-38, %v277
  %v279 = vsel %vm276, %v278, %v274
  %v280 = vmul.f32 1.0, %v279
  %v281 = vrcp.pop %v181
  %v282 = vmul.f32 %v181, %v281
  %v283 = vsub.f32 1.0, %v282
  %v284 = vmul.f32 %v281, %v283
  %v285 = vadd.f32 %v281, %v284
  %vm286 = vweird.f32 %v181
  %vm287 = vweird.f32 %v281
  %vm288 = vmor %vm286, %vm287
  %v289 = vsel %vm288, %v281, %v285
  %v290 = vand.u32 2147483647, %v181
  %vm291 = vcmp.eq.f32.partialorder %v290, 8.507059e+37
  %v292 = vand.u32 %v181, 2147483648
  %v293 = vor.u32 1.1754944e-38, %v292
  %v294 = vsel %vm291, %v293, %v289
  %v295 = vmul.f32 1.0, %v294
  %v296 = vrcp.pop %v182
  %v297 = vmul.f32 %v182, %v296
  %v298 = vsub.f32 1.0, %v297
  %v299 = vmul.f32 %v296, %v298
  %v300 = vadd.f32 %v296, %v299
  %vm301 = vweird.f32 %v182
  %vm302 = vweird.f32 %v296
  %vm303 = vmor %vm301, %vm302
  %v304 = vsel %vm303, %v296, %v300
  %v305 = vand.u32 2147483647, %v182
  %vm306 = vcmp.eq.f32.partialorder %v305, 8.507059e+37
  %v307 = vand.u32 %v182, 2147483648
  %v308 = vor.u32 1.1754944e-38, %v307
  %v309 = vsel %vm306, %v308, %v304
  %v310 = vmul.f32 1.0, %v309
  %v311 = vrcp.pop %v183
  %v312 = vmul.f32 %v183, %v311
  %v313 = vsub.f32 1.0, %v312
  %v314 = vmul.f32 %v311, %v313
  %v315 = vadd.f32 %v311, %v314
  %vm316 = vweird.f32 %v183
  %vm317 = vweird.f32 %v311
  %vm318 = vmor %vm316, %vm317
  %v319 = vsel %vm318, %v311, %v315
  %v320 = vand.u32 2147483647, %v183
  %vm321 = vcmp.eq.f32.partialorder %v320, 8.507059e+37
  %v322 = vand.u32 %v183, 2147483648
  %v323 = vor.u32 1.1754944e-38, %v322
  %v324 = vsel %vm321, %v323, %v319
  %v325 = vmul.f32 1.0, %v324
  %v326 = vrcp.pop %v184
  %v327 = vmul.f32 %v184, %v326
  %v328 = vsub.f32 1.0, %v327
  %v329 = vmul.f32 %v326, %v328
  %v330 = vadd.f32 %v326, %v329
  %vm331 = vweird.f32 %v184
  %vm332 = vweird.f32 %v326
  %vm333 = vmor %vm331, %vm332
  %v334 = vsel %vm333, %v326, %v330
  %v335 = vand.u32 2147483647, %v184
  %vm336 = vcmp.eq.f32.partialorder %v335, 8.507059e+37
  %v337 = vand.u32 %v184, 2147483648
  %v338 = vor.u32 1.1754944e-38, %v337
  %v339 = vsel %vm336, %v338, %v334
  %v340 = vmul.f32 1.0, %v339
  %v341 = vrcp.pop %v185
  %v342 = vmul.f32 %v185, %v341
  %v343 = vsub.f32 1.0, %v342
  %v344 = vmul.f32 %v341, %v343
  %v345 = vadd.f32 %v341, %v344
  %vm346 = vweird.f32 %v185
  %vm347 = vweird.f32 %v341
  %vm348 = vmor %vm346, %vm347
  %v349 = vsel %vm348, %v341, %v345
  %v350 = vand.u32 2147483647, %v185
  %vm351 = vcmp.eq.f32.partialorder %v350, 8.507059e+37
  %v352 = vand.u32 %v185, 2147483648
  %v353 = vor.u32 1.1754944e-38, %v352
  %v354 = vsel %vm351, %v353, %v349
  %v355 = vmul.f32 1.0, %v354
  %v356 = vrcp.pop %v186
  %v357 = vmul.f32 %v186, %v356
  %v358 = vsub.f32 1.0, %v357
  %v359 = vmul.f32 %v356, %v358
  %v360 = vadd.f32 %v356, %v359
  %vm361 = vweird.f32 %v186
  %vm362 = vweird.f32 %v356
  %vm363 = vmor %vm361, %vm362
  %v364 = vsel %vm363, %v356, %v360
  %v365 = vand.u32 2147483647, %v186
  %vm366 = vcmp.eq.f32.partialorder %v365, 8.507059e+37
  %v367 = vand.u32 %v186, 2147483648
  %v368 = vor.u32 1.1754944e-38, %v367
  %v369 = vsel %vm366, %v368, %v364
  %v370 = vmul.f32 1.0, %v369
  %v371 = vrcp.pop %v187
  %v372 = vmul.f32 %v187, %v371
  %v373 = vsub.f32 1.0, %v372
  %v374 = vmul.f32 %v371, %v373
  %v375 = vadd.f32 %v371, %v374
  %vm376 = vweird.f32 %v187
  %vm377 = vweird.f32 %v371
  %vm378 = vmor %vm376, %vm377
  %v379 = vsel %vm378, %v371, %v375
  %v380 = vand.u32 2147483647, %v187
  %vm381 = vcmp.eq.f32.partialorder %v380, 8.507059e+37
  %v382 = vand.u32 %v187, 2147483648
  %v383 = vor.u32 1.1754944e-38, %v382
  %v384 = vsel %vm381, %v383, %v379
  %v385 = vmul.f32 1.0, %v384
  %v386 = vrcp.pop %v188
  %v387 = vmul.f32 %v188, %v386
  %v388 = vsub.f32 1.0, %v387
  %v389 = vmul.f32 %v386, %v388
  %v390 = vadd.f32 %v386, %v389
  %vm391 = vweird.f32 %v188
  %vm392 = vweird.f32 %v386
  %vm393 = vmor %vm391, %vm392
  %v394 = vsel %vm393, %v386, %v390
  %v395 = vand.u32 2147483647, %v188
  %vm396 = vcmp.eq.f32.partialorder %v395, 8.507059e+37
  %v397 = vand.u32 %v188, 2147483648
  %v398 = vor.u32 1.1754944e-38, %v397
  %v399 = vsel %vm396, %v398, %v394
  %v400 = vmul.f32 1.0, %v399
  %v401 = vrcp.pop %v189
  %v402 = vmul.f32 %v189, %v401
  %v403 = vsub.f32 1.0, %v402
  %v404 = vmul.f32 %v401, %v403
  %v405 = vadd.f32 %v401, %v404
  %vm406 = vweird.f32 %v189
  %vm407 = vweird.f32 %v401
  %vm408 = vmor %vm406, %vm407
  %v409 = vsel %vm408, %v401, %v405
  %v410 = vand.u32 2147483647, %v189
  %vm411 = vcmp.eq.f32.partialorder %v410, 8.507059e+37
  %v412 = vand.u32 %v189, 2147483648
  %v413 = vor.u32 1.1754944e-38, %v412
  %v414 = vsel %vm411, %v413, %v409
  %v415 = vmul.f32 1.0, %v414
  %v416 = vrcp.pop %v190
  %v417 = vmul.f32 %v190, %v416
  %v418 = vsub.f32 1.0, %v417
  %v419 = vmul.f32 %v416, %v418
  %v420 = vadd.f32 %v416, %v419
  %vm421 = vweird.f32 %v190
  %vm422 = vweird.f32 %v416
  %vm423 = vmor %vm421, %vm422
  %v424 = vsel %vm423, %v416, %v420
  %v425 = vand.u32 2147483647, %v190
  %vm426 = vcmp.eq.f32.partialorder %v425, 8.507059e+37
  %v427 = vand.u32 %v190, 2147483648
  %v428 = vor.u32 1.1754944e-38, %v427
  %v429 = vsel %vm426, %v428, %v424
  %v430 = vmul.f32 1.0, %v429
  %431 = vst [vmem:[%s2] sm:$0xff] %v205
  %432 = vst [vmem:[%s2 + $0x8] sm:$0xff] %v220
  %433 = vst [vmem:[%s2 + $0x10] sm:$0xff] %v235
  %434 = vst [vmem:[%s2 + $0x18] sm:$0xff] %v250
  %435 = vst [vmem:[%s2 + $0x20] sm:$0xff] %v265
  %436 = vst [vmem:[%s2 + $0x28] sm:$0xff] %v280
  %437 = vst [vmem:[%s2 + $0x30] sm:$0xff] %v295
  %438 = vst [vmem:[%s2 + $0x38] sm:$0xff] %v310
  %439 = vst [vmem:[%s2 + $0x40] sm:$0xff] %v325
  %440 = vst [vmem:[%s2 + $0x48] sm:$0xff] %v340
  %441 = vst [vmem:[%s2 + $0x50] sm:$0xff] %v355
  %442 = vst [vmem:[%s2 + $0x58] sm:$0xff] %v370
  %443 = vst [vmem:[%s2 + $0x60] sm:$0xff] %v385
  %444 = vst [vmem:[%s2 + $0x68] sm:$0xff] %v400
  %445 = vst [vmem:[%s2 + $0x70] sm:$0xff] %v415
  %446 = vst [vmem:[%s2 + $0x78] sm:$0xff] %v430
  // Predicated region
  $region10: #{deepfm_forward.3} parent=0 // pred_check
    _
  $region11: #{deepfm_forward.3} parent=0 // pred_check_branch
    %448 = sbr.rel (0) target = $region13
  $region12: #{deepfm_forward.3} parent=0 // pred_region
    _
  $region13: #{deepfm_forward.3} parent=0 // pred_fallthru
    _
  // Predicated region
  $region14: #{deepfm_forward.3} parent=0 // pred_check
    _
  $region15: #{deepfm_forward.3} parent=0 // pred_check_branch
    %450 = sbr.rel (0) target = $region17
  $region16: #{deepfm_forward.3} parent=0 // pred_region
    _
  $region17: #{deepfm_forward.3} parent=0 // pred_fallthru
    _

// kernel: deepfm_forward.2
$region0: #{deepfm_forward.2}
  #allocation0 [shape = 'u32[]', space=smem, size = 0x4, offset = 0x4, fixed_abs, tag = 'smem constant byte address 0x4 - core index']
  #allocation1 [shape = 'u32[72,128]{1,0:T(1,128)}', space=vmem, size = 0x9000, scoped, tag = 'internal scratch']
  %s0 = inlined_call_operand.vmem [shape: s32[128,1], index: 0, kind: input, shape index: {}]
  %s1 = inlined_call_operand.vmem [shape: bf16[128,128], index: 1, kind: input, shape index: {}]
  %s2 = inlined_call_operand.vmem [shape: bf16[128,128], index: 2, kind: input, shape index: {}]
  %s3 = inlined_call_operand.vmem [shape: bf16[128,256], index: 3, kind: input, shape index: {}]
  %s4 = inlined_call_operand.vmem [shape: f32[1,640], index: 4, kind: input, shape index: {}]
  %s5 = inlined_call_operand.vmem [shape: f32[128,1], index: 5, kind: output, shape index: {0}]
  %s6 = inlined_call_operand.vmem [shape: f32[1,128], index: 6, kind: output, shape index: {1}]
  %7 = xla_tuple %s5, %s6
  %s8 = sld [smem:[#allocation0]]
  $region38: #{deepfm_forward.2} parent=0
    _
  %s10 = ssub.s32 1, %s8
  %s11 = scalar_select 0, %s10, %s8
  // Predicated region
  $region2: #{deepfm_forward.2} parent=0 // pred_check
    _
  $region3: #{deepfm_forward.2} parent=0 // pred_check_branch
    %13 = sbr.rel (0) target = $region5
  $region4: #{deepfm_forward.2} parent=0 // pred_region
    _
  $region5: #{deepfm_forward.2} parent=0 // pred_fallthru
    _
  // Predicated region
  $region6: #{deepfm_forward.2} parent=0 // pred_check
    _
  $region7: #{deepfm_forward.2} parent=0 // pred_check_branch
    %15 = sbr.rel (0) target = $region9
  $region8: #{deepfm_forward.2} parent=0 // pred_region
    _
  $region9: #{deepfm_forward.2} parent=0 // pred_fallthru
    _
  // Predicated region
  $region10: #{deepfm_forward.2} parent=0 // pred_check
    _
  $region11: #{deepfm_forward.2} parent=0 // pred_check_branch
    %17 = sbr.rel (0) target = $region13
  $region12: #{deepfm_forward.2} parent=0 // pred_region
    _
  $region13: #{deepfm_forward.2} parent=0 // pred_fallthru
    _
  // Predicated region
  $region14: #{deepfm_forward.2} parent=0 // pred_check
    _
  $region15: #{deepfm_forward.2} parent=0 // pred_check_branch
    %19 = sbr.rel (0) target = $region17
  $region16: #{deepfm_forward.2} parent=0 // pred_region
    _
  $region17: #{deepfm_forward.2} parent=0 // pred_fallthru
    _
  // Predicated region
  $region18: #{deepfm_forward.2} parent=0 // pred_check
    _
  $region19: #{deepfm_forward.2} parent=0 // pred_check_branch
    %21 = sbr.rel (0) target = $region21
  $region20: #{deepfm_forward.2} parent=0 // pred_region
    _
  $region21: #{deepfm_forward.2} parent=0 // pred_fallthru
    _
  %v22 = vlaneseq
  %v23 = vand.u32 %v22, 127
  %v24 = vld [vmem:[%s0] sm:$0xff]
  %v25 = vld [vmem:[%s0 + $0x8] sm:$0xff]
  %v26 = vld [vmem:[%s0 + $0x10] sm:$0xff]
  %v27 = vld [vmem:[%s0 + $0x18] sm:$0xff]
  %v28 = vld [vmem:[%s0 + $0x20] sm:$0xff]
  %v29 = vld [vmem:[%s0 + $0x28] sm:$0xff]
  %v30 = vld [vmem:[%s0 + $0x30] sm:$0xff]
  %v31 = vld [vmem:[%s0 + $0x38] sm:$0xff]
  %v32 = vld [vmem:[%s0 + $0x40] sm:$0xff]
  %v33 = vld [vmem:[%s0 + $0x48] sm:$0xff]
  %v34 = vld [vmem:[%s0 + $0x50] sm:$0xff]
  %v35 = vld [vmem:[%s0 + $0x58] sm:$0xff]
  %v36 = vld [vmem:[%s0 + $0x60] sm:$0xff]
  %v37 = vld [vmem:[%s0 + $0x68] sm:$0xff]
  %v38 = vld [vmem:[%s0 + $0x70] sm:$0xff]
  %v39 = vld [vmem:[%s0 + $0x78] sm:$0xff]
  %40 = vset.pattern.permute.xlu0 0
  %41 = vperm.xlu0 %40, %v24
  %v42 = vpop.permute.xlu0 %41
  %43 = vset.pattern.permute.xlu0 0
  %44 = vperm.xlu0 %43, %v25
  %v45 = vpop.permute.xlu0 %44
  %46 = vset.pattern.permute.xlu0 0
  %47 = vperm.xlu0 %46, %v26
  %v48 = vpop.permute.xlu0 %47
  %49 = vset.pattern.permute.xlu0 0
  %50 = vperm.xlu0 %49, %v27
  %v51 = vpop.permute.xlu0 %50
  %52 = vset.pattern.permute.xlu0 0
  %53 = vperm.xlu0 %52, %v28
  %v54 = vpop.permute.xlu0 %53
  %55 = vset.pattern.permute.xlu0 0
  %56 = vperm.xlu0 %55, %v29
  %v57 = vpop.permute.xlu0 %56
  %58 = vset.pattern.permute.xlu0 0
  %59 = vperm.xlu0 %58, %v30
  %v60 = vpop.permute.xlu0 %59
  %61 = vset.pattern.permute.xlu0 0
  %62 = vperm.xlu0 %61, %v31
  %v63 = vpop.permute.xlu0 %62
  %64 = vset.pattern.permute.xlu0 0
  %65 = vperm.xlu0 %64, %v32
  %v66 = vpop.permute.xlu0 %65
  %67 = vset.pattern.permute.xlu0 0
  %68 = vperm.xlu0 %67, %v33
  %v69 = vpop.permute.xlu0 %68
  %70 = vset.pattern.permute.xlu0 0
  %71 = vperm.xlu0 %70, %v34
  %v72 = vpop.permute.xlu0 %71
  %73 = vset.pattern.permute.xlu0 0
  %74 = vperm.xlu0 %73, %v35
  %v75 = vpop.permute.xlu0 %74
  %76 = vset.pattern.permute.xlu0 0
  %77 = vperm.xlu0 %76, %v36
  %v78 = vpop.permute.xlu0 %77
  %79 = vset.pattern.permute.xlu0 0
  %80 = vperm.xlu0 %79, %v37
  %v81 = vpop.permute.xlu0 %80
  %82 = vset.pattern.permute.xlu0 0
  %83 = vperm.xlu0 %82, %v38
  %v84 = vpop.permute.xlu0 %83
  %85 = vset.pattern.permute.xlu0 0
  %86 = vperm.xlu0 %85, %v39
  %v87 = vpop.permute.xlu0 %86
  %vm88 = vcmp.eq.s32.totalorder %v23, %v42
  %vm89 = vcmp.eq.s32.totalorder %v23, %v45
  %vm90 = vcmp.eq.s32.totalorder %v23, %v48
  %vm91 = vcmp.eq.s32.totalorder %v23, %v51
  %vm92 = vcmp.eq.s32.totalorder %v23, %v54
  %vm93 = vcmp.eq.s32.totalorder %v23, %v57
  %vm94 = vcmp.eq.s32.totalorder %v23, %v60
  %vm95 = vcmp.eq.s32.totalorder %v23, %v63
  %vm96 = vcmp.eq.s32.totalorder %v23, %v66
  %vm97 = vcmp.eq.s32.totalorder %v23, %v69
  %vm98 = vcmp.eq.s32.totalorder %v23, %v72
  %vm99 = vcmp.eq.s32.totalorder %v23, %v75
  %vm100 = vcmp.eq.s32.totalorder %v23, %v78
  %vm101 = vcmp.eq.s32.totalorder %v23, %v81
  %vm102 = vcmp.eq.s32.totalorder %v23, %v84
  %vm103 = vcmp.eq.s32.totalorder %v23, %v87
  %v104 = vsel %vm88, 1.0, 0.0
  %v105 = vsel %vm89, 1.0, 0.0
  %v106 = vsel %vm90, 1.0, 0.0
  %v107 = vsel %vm91, 1.0, 0.0
  %v108 = vsel %vm92, 1.0, 0.0
  %v109 = vsel %vm93, 1.0, 0.0
  %v110 = vsel %vm94, 1.0, 0.0
  %v111 = vsel %vm95, 1.0, 0.0
  %v112 = vsel %vm96, 1.0, 0.0
  %v113 = vsel %vm97, 1.0, 0.0
  %v114 = vsel %vm98, 1.0, 0.0
  %v115 = vsel %vm99, 1.0, 0.0
  %v116 = vsel %vm100, 1.0, 0.0
  %v117 = vsel %vm101, 1.0, 0.0
  %v118 = vsel %vm102, 1.0, 0.0
  %v119 = vsel %vm103, 1.0, 0.0
  %v120 = vpack.c.bf16 %v105, %v104
  %v121 = vpack.c.bf16 %v107, %v106
  %v122 = vpack.c.bf16 %v109, %v108
  %v123 = vpack.c.bf16 %v111, %v110
  %v124 = vpack.c.bf16 %v113, %v112
  %v125 = vpack.c.bf16 %v115, %v114
  %v126 = vpack.c.bf16 %v117, %v116
  %v127 = vpack.c.bf16 %v119, %v118
  %v128 = vld [vmem:[%s2] sm:$0xf]
  %v129 = vld [vmem:[%s2 + $0x4] sm:$0xf]
  %v130 = vld [vmem:[%s2 + $0x8] sm:$0xf]
  %v131 = vld [vmem:[%s2 + $0xc] sm:$0xf]
  %v132 = vld [vmem:[%s2 + $0x10] sm:$0xf]
  %v133 = vld [vmem:[%s2 + $0x14] sm:$0xf]
  %v134 = vld [vmem:[%s2 + $0x18] sm:$0xf]
  %v135 = vld [vmem:[%s2 + $0x1c] sm:$0xf]
  %v136 = vld [vmem:[%s2 + $0x20] sm:$0xf]
  %v137 = vld [vmem:[%s2 + $0x24] sm:$0xf]
  %v138 = vld [vmem:[%s2 + $0x28] sm:$0xf]
  %v139 = vld [vmem:[%s2 + $0x2c] sm:$0xf]
  %v140 = vld [vmem:[%s2 + $0x30] sm:$0xf]
  %v141 = vld [vmem:[%s2 + $0x34] sm:$0xf]
  %v142 = vld [vmem:[%s2 + $0x38] sm:$0xf]
  %v143 = vld [vmem:[%s2 + $0x3c] sm:$0xf]
  %v144 = vld [vmem:[%s1] sm:$0xf]
  %v145 = vld [vmem:[%s1 + $0x4] sm:$0xf]
  %v146 = vld [vmem:[%s1 + $0x8] sm:$0xf]
  %v147 = vld [vmem:[%s1 + $0xc] sm:$0xf]
  %v148 = vld [vmem:[%s1 + $0x10] sm:$0xf]
  %v149 = vld [vmem:[%s1 + $0x14] sm:$0xf]
  %v150 = vld [vmem:[%s1 + $0x18] sm:$0xf]
  %v151 = vld [vmem:[%s1 + $0x1c] sm:$0xf]
  %v152 = vld [vmem:[%s1 + $0x20] sm:$0xf]
  %v153 = vld [vmem:[%s1 + $0x24] sm:$0xf]
  %v154 = vld [vmem:[%s1 + $0x28] sm:$0xf]
  %v155 = vld [vmem:[%s1 + $0x2c] sm:$0xf]
  %v156 = vld [vmem:[%s1 + $0x30] sm:$0xf]
  %v157 = vld [vmem:[%s1 + $0x34] sm:$0xf]
  %v158 = vld [vmem:[%s1 + $0x38] sm:$0xf]
  %v159 = vld [vmem:[%s1 + $0x3c] sm:$0xf]
  %v160 = vunpack.c.l.bf16 %v144
  %v161 = vunpack.c.l.bf16 %v145
  %v162 = vunpack.c.l.bf16 %v146
  %v163 = vunpack.c.l.bf16 %v147
  %v164 = vunpack.c.l.bf16 %v148
  %v165 = vunpack.c.l.bf16 %v149
  %v166 = vunpack.c.l.bf16 %v150
  %v167 = vunpack.c.l.bf16 %v151
  %v168 = vunpack.c.l.bf16 %v152
  %v169 = vunpack.c.l.bf16 %v153
  %v170 = vunpack.c.l.bf16 %v154
  %v171 = vunpack.c.l.bf16 %v155
  %v172 = vunpack.c.l.bf16 %v156
  %v173 = vunpack.c.l.bf16 %v157
  %v174 = vunpack.c.l.bf16 %v158
  %v175 = vunpack.c.l.bf16 %v159
  %v192 = vunpack.c.l.b16 %v128
  %v193 = vunpack.c.l.b16 %v129
  %v194 = vunpack.c.l.b16 %v130
  %v195 = vunpack.c.l.b16 %v131
  %v196 = vunpack.c.l.b16 %v132
  %v197 = vunpack.c.l.b16 %v133
  %v198 = vunpack.c.l.b16 %v134
  %v199 = vunpack.c.l.b16 %v135
  %v200 = vunpack.c.l.b16 %v136
  %v201 = vunpack.c.l.b16 %v137
  %v202 = vunpack.c.l.b16 %v138
  %v203 = vunpack.c.l.b16 %v139
  %v204 = vunpack.c.l.b16 %v140
  %v205 = vunpack.c.l.b16 %v141
  %v206 = vunpack.c.l.b16 %v142
  %v207 = vunpack.c.l.b16 %v143
  %v208 = vpack.c.b16 %v193, %v192
  %v209 = vpack.c.b16 %v195, %v194
  %v210 = vpack.c.b16 %v197, %v196
  %v211 = vpack.c.b16 %v199, %v198
  %v212 = vpack.c.b16 %v201, %v200
  %v213 = vpack.c.b16 %v203, %v202
  %v214 = vpack.c.b16 %v205, %v204
  %v215 = vpack.c.b16 %v207, %v206
  %224 = vmatpush.bf16.msra.mxu0 %v215
  %225 = vmatpush.bf16.msra.mxu0 %v214
  %226 = vmatpush.bf16.msra.mxu0 %v213
  %227 = vmatpush.bf16.msra.mxu0 %v212
  %228 = vmatpush.bf16.msra.mxu0 %v211
  %229 = vmatpush.bf16.msra.mxu0 %v210
  %230 = vmatpush.bf16.msra.mxu0 %v209
  %231 = vmatpush.bf16.msra.mxu0 %v208
  %232 = vmatmul.bf16.gmra.mxu0 %v120
  %v233 = vpop.f32.mrf.mxu0
  %v234 = vadd.f32 %v160, %v233
  %v235 = vpop.f32.mrf.mxu0
  %v236 = vadd.f32 %v161, %v235
  %237 = vmatmul.bf16.gmra.mxu0 %v121
  %v238 = vpop.f32.mrf.mxu0
  %v239 = vadd.f32 %v162, %v238
  %v240 = vpop.f32.mrf.mxu0
  %v241 = vadd.f32 %v163, %v240
  %242 = vmatmul.bf16.gmra.mxu0 %v122
  %v243 = vpop.f32.mrf.mxu0
  %v244 = vadd.f32 %v164, %v243
  %v245 = vpop.f32.mrf.mxu0
  %v246 = vadd.f32 %v165, %v245
  %247 = vmatmul.bf16.gmra.mxu0 %v123
  %v248 = vpop.f32.mrf.mxu0
  %v249 = vadd.f32 %v166, %v248
  %v250 = vpop.f32.mrf.mxu0
  %v251 = vadd.f32 %v167, %v250
  %252 = vmatmul.bf16.gmra.mxu0 %v124
  %v253 = vpop.f32.mrf.mxu0
  %v254 = vadd.f32 %v168, %v253
  %v255 = vpop.f32.mrf.mxu0
  %v256 = vadd.f32 %v169, %v255
  %257 = vmatmul.bf16.gmra.mxu0 %v125
  %v258 = vpop.f32.mrf.mxu0
  %v259 = vadd.f32 %v170, %v258
  %v260 = vpop.f32.mrf.mxu0
  %v261 = vadd.f32 %v171, %v260
  %262 = vmatmul.bf16.gmra.mxu0 %v126
  %v263 = vpop.f32.mrf.mxu0
  %v264 = vadd.f32 %v172, %v263
  %v265 = vpop.f32.mrf.mxu0
  %v266 = vadd.f32 %v173, %v265
  %267 = vmatmul.bf16.gmra.mxu0 %v127
  %v268 = vpop.f32.mrf.mxu0
  %v269 = vadd.f32 %v174, %v268
  %v270 = vpop.f32.mrf.mxu0
  %v271 = vadd.f32 %v175, %v270
  %272 = vdwg.mxu0
  %v273 = vld [vmem:[%s3] sm:$0xf]
  %v274 = vld [vmem:[%s3 + $0x8] sm:$0xf]
  %v275 = vld [vmem:[%s3 + $0x10] sm:$0xf]
  %v276 = vld [vmem:[%s3 + $0x18] sm:$0xf]
  %v277 = vld [vmem:[%s3 + $0x20] sm:$0xf]
  %v278 = vld [vmem:[%s3 + $0x28] sm:$0xf]
  %v279 = vld [vmem:[%s3 + $0x30] sm:$0xf]
  %v280 = vld [vmem:[%s3 + $0x38] sm:$0xf]
  %v281 = vld [vmem:[%s3 + $0x40] sm:$0xf]
  %v282 = vld [vmem:[%s3 + $0x48] sm:$0xf]
  %v283 = vld [vmem:[%s3 + $0x50] sm:$0xf]
  %v284 = vld [vmem:[%s3 + $0x58] sm:$0xf]
  %v285 = vld [vmem:[%s3 + $0x60] sm:$0xf]
  %v286 = vld [vmem:[%s3 + $0x68] sm:$0xf]
  %v287 = vld [vmem:[%s3 + $0x70] sm:$0xf]
  %v288 = vld [vmem:[%s3 + $0x78] sm:$0xf]
  %v289 = vld [vmem:[%s4] sm:$0x1]
  %v290 = vpack.c.bf16 %v236, %v234
  %v291 = vpack.c.bf16 %v241, %v239
  %v292 = vpack.c.bf16 %v246, %v244
  %v293 = vpack.c.bf16 %v251, %v249
  %v294 = vpack.c.bf16 %v256, %v254
  %v295 = vpack.c.bf16 %v261, %v259
  %v296 = vpack.c.bf16 %v266, %v264
  %v297 = vpack.c.bf16 %v271, %v269
  %v299 = vperm.slane %v289, 0
  %v317 = vunpack.c.l.b16 %v273
  %v318 = vunpack.c.l.b16 %v274
  %v319 = vunpack.c.l.b16 %v275
  %v320 = vunpack.c.l.b16 %v276
  %v321 = vunpack.c.l.b16 %v277
  %v322 = vunpack.c.l.b16 %v278
  %v323 = vunpack.c.l.b16 %v279
  %v324 = vunpack.c.l.b16 %v280
  %v325 = vunpack.c.l.b16 %v281
  %v326 = vunpack.c.l.b16 %v282
  %v327 = vunpack.c.l.b16 %v283
  %v328 = vunpack.c.l.b16 %v284
  %v329 = vunpack.c.l.b16 %v285
  %v330 = vunpack.c.l.b16 %v286
  %v331 = vunpack.c.l.b16 %v287
  %v332 = vunpack.c.l.b16 %v288
  %v333 = vpack.c.b16 %v318, %v317
  %v334 = vpack.c.b16 %v320, %v319
  %v335 = vpack.c.b16 %v322, %v321
  %v336 = vpack.c.b16 %v324, %v323
  %v337 = vpack.c.b16 %v326, %v325
  %v338 = vpack.c.b16 %v328, %v327
  %v339 = vpack.c.b16 %v330, %v329
  %v340 = vpack.c.b16 %v332, %v331
  %349 = vmatpush.bf16.msra.mxu0 %v340
  %350 = vmatpush.bf16.msra.mxu0 %v339
  %351 = vmatpush.bf16.msra.mxu0 %v338
  %352 = vmatpush.bf16.msra.mxu0 %v337
  %353 = vmatpush.bf16.msra.mxu0 %v336
  %354 = vmatpush.bf16.msra.mxu0 %v335
  %355 = vmatpush.bf16.msra.mxu0 %v334
  %356 = vmatpush.bf16.msra.mxu0 %v333
  %357 = vmatmul.bf16.gmra.mxu0 %v290
  %v358 = vpop.f32.mrf.mxu0
  %v359 = vadd.f32 %v299, %v358
  %v360 = vpop.f32.mrf.mxu0
  %v361 = vadd.f32 %v299, %v360
  %362 = vmatmul.bf16.gmra.mxu0 %v291
  %v363 = vpop.f32.mrf.mxu0
  %v364 = vadd.f32 %v299, %v363
  %v365 = vpop.f32.mrf.mxu0
  %v366 = vadd.f32 %v299, %v365
  %367 = vmatmul.bf16.gmra.mxu0 %v292
  %v368 = vpop.f32.mrf.mxu0
  %v369 = vadd.f32 %v299, %v368
  %v370 = vpop.f32.mrf.mxu0
  %v371 = vadd.f32 %v299, %v370
  %372 = vmatmul.bf16.gmra.mxu0 %v293
  %v373 = vpop.f32.mrf.mxu0
  %v374 = vadd.f32 %v299, %v373
  %v375 = vpop.f32.mrf.mxu0
  %v376 = vadd.f32 %v299, %v375
  %377 = vmatmul.bf16.gmra.mxu0 %v294
  %v378 = vpop.f32.mrf.mxu0
  %v379 = vadd.f32 %v299, %v378
  %v380 = vpop.f32.mrf.mxu0
  %v381 = vadd.f32 %v299, %v380
  %382 = vmatmul.bf16.gmra.mxu0 %v295
  %v383 = vpop.f32.mrf.mxu0
  %v384 = vadd.f32 %v299, %v383
  %v385 = vpop.f32.mrf.mxu0
  %v386 = vadd.f32 %v299, %v385
  %387 = vmatmul.bf16.gmra.mxu0 %v296
  %v388 = vpop.f32.mrf.mxu0
  %v389 = vadd.f32 %v299, %v388
  %v390 = vpop.f32.mrf.mxu0
  %v391 = vadd.f32 %v299, %v390
  %392 = vmatmul.bf16.gmra.mxu0 %v297
  %v393 = vpop.f32.mrf.mxu0
  %v394 = vadd.f32 %v299, %v393
  %v395 = vpop.f32.mrf.mxu0
  %v396 = vadd.f32 %v299, %v395
  %397 = vdwg.mxu0
  %v398 = vmax.f32 %v359, 0.0
  %v399 = vmax.f32 %v361, 0.0
  %v400 = vmax.f32 %v364, 0.0
  %v401 = vmax.f32 %v366, 0.0
  %v402 = vmax.f32 %v369, 0.0
  %v403 = vmax.f32 %v371, 0.0
  %v404 = vmax.f32 %v374, 0.0
  %v405 = vmax.f32 %v376, 0.0
  %v406 = vmax.f32 %v379, 0.0
  %v407 = vmax.f32 %v381, 0.0
  %v408 = vmax.f32 %v384, 0.0
  %v409 = vmax.f32 %v386, 0.0
  %v410 = vmax.f32 %v389, 0.0
  %v411 = vmax.f32 %v391, 0.0
  %v412 = vmax.f32 %v394, 0.0
  %v413 = vmax.f32 %v396, 0.0
  %v414 = vld [vmem:[%s3 + $0x4] sm:$0xf]
  %v415 = vld [vmem:[%s3 + $0xc] sm:$0xf]
  %v416 = vld [vmem:[%s3 + $0x14] sm:$0xf]
  %v417 = vld [vmem:[%s3 + $0x1c] sm:$0xf]
  %v418 = vld [vmem:[%s3 + $0x24] sm:$0xf]
  %v419 = vld [vmem:[%s3 + $0x2c] sm:$0xf]
  %v420 = vld [vmem:[%s3 + $0x34] sm:$0xf]
  %v421 = vld [vmem:[%s3 + $0x3c] sm:$0xf]
  %v422 = vld [vmem:[%s3 + $0x44] sm:$0xf]
  %v423 = vld [vmem:[%s3 + $0x4c] sm:$0xf]
  %v424 = vld [vmem:[%s3 + $0x54] sm:$0xf]
  %v425 = vld [vmem:[%s3 + $0x5c] sm:$0xf]
  %v426 = vld [vmem:[%s3 + $0x64] sm:$0xf]
  %v427 = vld [vmem:[%s3 + $0x6c] sm:$0xf]
  %v428 = vld [vmem:[%s3 + $0x74] sm:$0xf]
  %v429 = vld [vmem:[%s3 + $0x7c] sm:$0xf]
  %v430 = vld [vmem:[%s4 + $0x1] sm:$0x1]
  %v431 = vpack.c.bf16 %v399, %v398
  %v432 = vpack.c.bf16 %v401, %v400
  %v433 = vpack.c.bf16 %v403, %v402
  %v434 = vpack.c.bf16 %v405, %v404
  %v435 = vpack.c.bf16 %v407, %v406
  %v436 = vpack.c.bf16 %v409, %v408
  %v437 = vpack.c.bf16 %v411, %v410
  %v438 = vpack.c.bf16 %v413, %v412
  %v440 = vperm.slane %v430, 0
  %v458 = vunpack.c.l.b16 %v414
  %v459 = vunpack.c.l.b16 %v415
  %v460 = vunpack.c.l.b16 %v416
  %v461 = vunpack.c.l.b16 %v417
  %v462 = vunpack.c.l.b16 %v418
  %v463 = vunpack.c.l.b16 %v419
  %v464 = vunpack.c.l.b16 %v420
  %v465 = vunpack.c.l.b16 %v421
  %v466 = vunpack.c.l.b16 %v422
  %v467 = vunpack.c.l.b16 %v423
  %v468 = vunpack.c.l.b16 %v424
  %v469 = vunpack.c.l.b16 %v425
  %v470 = vunpack.c.l.b16 %v426
  %v471 = vunpack.c.l.b16 %v427
  %v472 = vunpack.c.l.b16 %v428
  %v473 = vunpack.c.l.b16 %v429
  %v474 = vpack.c.b16 %v459, %v458
  %v475 = vpack.c.b16 %v461, %v460
  %v476 = vpack.c.b16 %v463, %v462
  %v477 = vpack.c.b16 %v465, %v464
  %v478 = vpack.c.b16 %v467, %v466
  %v479 = vpack.c.b16 %v469, %v468
  %v480 = vpack.c.b16 %v471, %v470
  %v481 = vpack.c.b16 %v473, %v472
  %490 = vmatpush.bf16.msra.mxu0 %v481
  %491 = vmatpush.bf16.msra.mxu0 %v480
  %492 = vmatpush.bf16.msra.mxu0 %v479
  %493 = vmatpush.bf16.msra.mxu0 %v478
  %494 = vmatpush.bf16.msra.mxu0 %v477
  %495 = vmatpush.bf16.msra.mxu0 %v476
  %496 = vmatpush.bf16.msra.mxu0 %v475
  %497 = vmatpush.bf16.msra.mxu0 %v474
  %498 = vmatmul.bf16.gmra.mxu0 %v431
  %v499 = vpop.f32.mrf.mxu0
  %v500 = vadd.f32 %v440, %v499
  %v501 = vpop.f32.mrf.mxu0
  %v502 = vadd.f32 %v440, %v501
  %503 = vmatmul.bf16.gmra.mxu0 %v432
  %v504 = vpop.f32.mrf.mxu0
  %v505 = vadd.f32 %v440, %v504
  %v506 = vpop.f32.mrf.mxu0
  %v507 = vadd.f32 %v440, %v506
  %508 = vmatmul.bf16.gmra.mxu0 %v433
  %v509 = vpop.f32.mrf.mxu0
  %v510 = vadd.f32 %v440, %v509
  %v511 = vpop.f32.mrf.mxu0
  %v512 = vadd.f32 %v440, %v511
  %513 = vmatmul.bf16.gmra.mxu0 %v434
  %v514 = vpop.f32.mrf.mxu0
  %v515 = vadd.f32 %v440, %v514
  %v516 = vpop.f32.mrf.mxu0
  %v517 = vadd.f32 %v440, %v516
  %518 = vmatmul.bf16.gmra.mxu0 %v435
  %v519 = vpop.f32.mrf.mxu0
  %v520 = vadd.f32 %v440, %v519
  %v521 = vpop.f32.mrf.mxu0
  %v522 = vadd.f32 %v440, %v521
  %523 = vmatmul.bf16.gmra.mxu0 %v436
  %v524 = vpop.f32.mrf.mxu0
  %v525 = vadd.f32 %v440, %v524
  %v526 = vpop.f32.mrf.mxu0
  %v527 = vadd.f32 %v440, %v526
  %528 = vmatmul.bf16.gmra.mxu0 %v437
  %v529 = vpop.f32.mrf.mxu0
  %v530 = vadd.f32 %v440, %v529
  %v531 = vpop.f32.mrf.mxu0
  %v532 = vadd.f32 %v440, %v531
  %533 = vmatmul.bf16.gmra.mxu0 %v438
  %v534 = vpop.f32.mrf.mxu0
  %v535 = vadd.f32 %v440, %v534
  %v536 = vpop.f32.mrf.mxu0
  %v537 = vadd.f32 %v440, %v536
  %538 = vdwg.mxu0
  %v539 = vmax.f32 %v500, 0.0
  %v540 = vmax.f32 %v502, 0.0
  %v541 = vmax.f32 %v505, 0.0
  %v542 = vmax.f32 %v507, 0.0
  %v543 = vmax.f32 %v510, 0.0
  %v544 = vmax.f32 %v512, 0.0
  %v545 = vmax.f32 %v515, 0.0
  %v546 = vmax.f32 %v517, 0.0
  %v547 = vmax.f32 %v520, 0.0
  %v548 = vmax.f32 %v522, 0.0
  %v549 = vmax.f32 %v525, 0.0
  %v550 = vmax.f32 %v527, 0.0
  %v551 = vmax.f32 %v530, 0.0
  %v552 = vmax.f32 %v532, 0.0
  %v553 = vmax.f32 %v535, 0.0
  %v554 = vmax.f32 %v537, 0.0
  %v555 = vld [vmem:[%s4 + $0x2] sm:$0x1]
  %v556 = vld [vmem:[%s4 + $0x3] sm:$0x1]
  %v557 = vld [vmem:[%s4 + $0x4] sm:$0x1]
  %v559 = vperm.slane %v555, 0
  %v561 = vmul.f32 %v539, %v559
  %v562 = vmul.f32 %v540, %v559
  %v563 = vmul.f32 %v541, %v559
  %v564 = vmul.f32 %v542, %v559
  %v565 = vmul.f32 %v543, %v559
  %v566 = vmul.f32 %v544, %v559
  %v567 = vmul.f32 %v545, %v559
  %v568 = vmul.f32 %v546, %v559
  %v569 = vmul.f32 %v547, %v559
  %v570 = vmul.f32 %v548, %v559
  %v571 = vmul.f32 %v549, %v559
  %v572 = vmul.f32 %v550, %v559
  %v573 = vmul.f32 %v551, %v559
  %v574 = vmul.f32 %v552, %v559
  %v575 = vmul.f32 %v553, %v559
  %v576 = vmul.f32 %v554, %v559
  %577 = vadd.xlane.f32.xlu0 %v561
  %v578 = vpop.xlane.xlu0 %577
  %579 = vadd.xlane.f32.xlu0 %v562
  %v580 = vpop.xlane.xlu0 %579
  %581 = vadd.xlane.f32.xlu0 %v563
  %v582 = vpop.xlane.xlu0 %581
  %583 = vadd.xlane.f32.xlu0 %v564
  %v584 = vpop.xlane.xlu0 %583
  %585 = vadd.xlane.f32.xlu0 %v565
  %v586 = vpop.xlane.xlu0 %585
  %587 = vadd.xlane.f32.xlu0 %v566
  %v588 = vpop.xlane.xlu0 %587
  %589 = vadd.xlane.f32.xlu0 %v567
  %v590 = vpop.xlane.xlu0 %589
  %591 = vadd.xlane.f32.xlu0 %v568
  %v592 = vpop.xlane.xlu0 %591
  %593 = vadd.xlane.f32.xlu0 %v569
  %v594 = vpop.xlane.xlu0 %593
  %595 = vadd.xlane.f32.xlu0 %v570
  %v596 = vpop.xlane.xlu0 %595
  %597 = vadd.xlane.f32.xlu0 %v571
  %v598 = vpop.xlane.xlu0 %597
  %599 = vadd.xlane.f32.xlu0 %v572
  %v600 = vpop.xlane.xlu0 %599
  %601 = vadd.xlane.f32.xlu0 %v573
  %v602 = vpop.xlane.xlu0 %601
  %603 = vadd.xlane.f32.xlu0 %v574
  %v604 = vpop.xlane.xlu0 %603
  %605 = vadd.xlane.f32.xlu0 %v575
  %v606 = vpop.xlane.xlu0 %605
  %607 = vadd.xlane.f32.xlu0 %v576
  %v608 = vpop.xlane.xlu0 %607
  %v610 = vperm.slane %v557, 0
  %v612 = vadd.f32 %v578, %v610
  %v613 = vadd.f32 %v580, %v610
  %v614 = vadd.f32 %v582, %v610
  %v615 = vadd.f32 %v584, %v610
  %v616 = vadd.f32 %v586, %v610
  %v617 = vadd.f32 %v588, %v610
  %v618 = vadd.f32 %v590, %v610
  %v619 = vadd.f32 %v592, %v610
  %v620 = vadd.f32 %v594, %v610
  %v621 = vadd.f32 %v596, %v610
  %v622 = vadd.f32 %v598, %v610
  %v623 = vadd.f32 %v600, %v610
  %v624 = vadd.f32 %v602, %v610
  %v625 = vadd.f32 %v604, %v610
  %v626 = vadd.f32 %v606, %v610
  %v627 = vadd.f32 %v608, %v610
  %vm628 = vcmask 7168
  %629 = vst.msk [vmem:[%s5] sm:$0xff] %vm628, %v612
  %630 = vst.msk [vmem:[%s5 + $0x8] sm:$0xff] %vm628, %v613
  %631 = vst.msk [vmem:[%s5 + $0x10] sm:$0xff] %vm628, %v614
  %632 = vst.msk [vmem:[%s5 + $0x18] sm:$0xff] %vm628, %v615
  %633 = vst.msk [vmem:[%s5 + $0x20] sm:$0xff] %vm628, %v616
  %634 = vst.msk [vmem:[%s5 + $0x28] sm:$0xff] %vm628, %v617
  %635 = vst.msk [vmem:[%s5 + $0x30] sm:$0xff] %vm628, %v618
  %636 = vst.msk [vmem:[%s5 + $0x38] sm:$0xff] %vm628, %v619
  %637 = vst.msk [vmem:[%s5 + $0x40] sm:$0xff] %vm628, %v620
  %638 = vst.msk [vmem:[%s5 + $0x48] sm:$0xff] %vm628, %v621
  %639 = vst.msk [vmem:[%s5 + $0x50] sm:$0xff] %vm628, %v622
  %640 = vst.msk [vmem:[%s5 + $0x58] sm:$0xff] %vm628, %v623
  %641 = vst.msk [vmem:[%s5 + $0x60] sm:$0xff] %vm628, %v624
  %642 = vst.msk [vmem:[%s5 + $0x68] sm:$0xff] %vm628, %v625
  %643 = vst.msk [vmem:[%s5 + $0x70] sm:$0xff] %vm628, %v626
  %644 = vst.msk [vmem:[%s5 + $0x78] sm:$0xff] %vm628, %v627
  %645 = vset.pattern.permute.xlu0 1
  %646 = vperm.xlu0 %645, %v557
  %v647 = vpop.permute.xlu0 %646
  %v649 = vperm.slane %v647, 0
  %650 = vmatpush.xpose.msra.mxu0 %v271
  %651 = vmatpush.xpose.msra.mxu0 %v269
  %652 = vmatpush.xpose.msra.mxu0 %v266
  %653 = vmatpush.xpose.msra.mxu0 %v264
  %654 = vmatpush.xpose.msra.mxu0 %v261
  %655 = vmatpush.xpose.msra.mxu0 %v259
  %656 = vmatpush.xpose.msra.mxu0 %v256
  %657 = vmatpush.xpose.msra.mxu0 %v254
  %658 = vmatpush.xpose.msra.mxu0 %v251
  %659 = vmatpush.xpose.msra.mxu0 %v249
  %660 = vmatpush.xpose.msra.mxu0 %v246
  %661 = vmatpush.xpose.msra.mxu0 %v244
  %662 = vmatpush.xpose.msra.mxu0 %v241
  %663 = vmatpush.xpose.msra.mxu0 %v239
  %664 = vmatpush.xpose.msra.mxu0 %v236
  %665 = vmatpush.xpose.msra.mxu0 %v234
  %666 = vmatmul.f32.gmra.mxu0 %v556
  %v667 = vpop.f32.mrf.mxu0
  %v668 = vadd.f32 %v649, %v667
  %669 = vdwg.mxu0
  %670 = vst [vmem:[%s6] sm:$0x1] %v668
  // Predicated region
  $region22: #{deepfm_forward.2} parent=0 // pred_check
    _
  $region23: #{deepfm_forward.2} parent=0 // pred_check_branch
    %672 = sbr.rel (0) target = $region25
  $region24: #{deepfm_forward.2} parent=0 // pred_region
    _
  $region25: #{deepfm_forward.2} parent=0 // pred_fallthru
    _
  // Predicated region
  $region26: #{deepfm_forward.2} parent=0 // pred_check
    _
  $region27: #{deepfm_forward.2} parent=0 // pred_check_branch
    %674 = sbr.rel (0) target = $region29
  $region28: #{deepfm_forward.2} parent=0 // pred_region
    _
  $region29: #{deepfm_forward.2} parent=0 // pred_fallthru
    _
  // Predicated region
  $region30: #{deepfm_forward.2} parent=0 // pred_check
    _
  $region31: #{deepfm_forward.2} parent=0 // pred_check_branch
    %676 = sbr.rel (0) target = $region33
  $region32: #{deepfm_forward.2} parent=0 // pred_region
    _
  $region33: #{deepfm_forward.2} parent=0 // pred_fallthru
    _
  // Predicated region
  $region34: #{deepfm_forward.2} parent=0 // pred_check
    _
  $region35: #{deepfm_forward.2} parent=0 // pred_check_branch
    %678 = sbr.rel (0) target = $region37
  $region36: #{deepfm_forward.2} parent=0 // pred_region
    _
  $region37: #{deepfm_forward.2} parent=0 // pred_fallthru
    _

</llo_original>
